<compile_context>
chip_gen: v7x
topology: tpu7x:2x2x1
jax: 0.10.0
libtpu: 0.0.40
codegen_flags: <defaults>
</compile_context>

<pallas_src>
import numpy as np
import jax
import jax.numpy as jnp
from jax.experimental import pallas as pl
from jax.experimental.pallas import tpu as pltpu


_DEFAULT_MIN_PALLAS_BYTES = 1 << 20  # below this a fused XLA multiply wins


# ------------------------------ kernels -------------------------------------


def _row_mask_kernel(mask_ref, x_ref, o_ref):
    # mask_ref: (TC, 1); x_ref/o_ref: (TC, TR). Sublane-indexed mask,
    # broadcast along lanes on the VPU (memory-bound elementwise multiply).
    o_ref[...] = x_ref[...] * mask_ref[...]


def _lane_mask_kernel(mask_ref, x_ref, o_ref):
    # mask_ref: (1, TR); x_ref/o_ref: (T0, TR). Lane-indexed mask -> lane-dense
    # stores, pure per-lane VPU multiply (bias / last-dim case).
    o_ref[...] = x_ref[...] * mask_ref[...]


# --------------------------- tile-size helpers -------------------------------


def _lane_tile(n):
    # Full extent is always legal; otherwise use a multiple of 128.
    return n if n <= 2048 else 1024


def _sublane_tile(n):
    # Full extent is always legal; otherwise 256 (multiple of 8/16/32 for
    # f32/bf16/int8 sublane packing).
    return n if n <= 256 else 256


# ------------------------------ pallas wrappers ------------------------------


def _masked_mul_rowmask_2d(mask_col, x2):
    """x2: (C, R) masked along rows with mask_col: (C, 1)."""
    c, r = x2.shape
    tc, tr = _sublane_tile(c), _lane_tile(r)
    return pl.pallas_call(
        _row_mask_kernel,
        out_shape=jax.ShapeDtypeStruct((c, r), x2.dtype),
        grid=(pl.cdiv(c, tc), pl.cdiv(r, tr)),
        in_specs=[
            pl.BlockSpec((tc, 1), lambda i, j: (i, 0)),
            pl.BlockSpec((tc, tr), lambda i, j: (i, j)),
        ],
        out_specs=pl.BlockSpec((tc, tr), lambda i, j: (i, j)),
        compiler_params=pltpu.CompilerParams(
            dimension_semantics=("parallel", "parallel")),
    )(mask_col, x2)


def _masked_mul_lanemask_2d(mask_row, x2):
    """x2: (P, C) masked along lanes (last dim) with mask_row: (1, C)."""
    p, c = x2.shape
    tp, tc = _sublane_tile(p), _lane_tile(c)
    return pl.pallas_call(
        _lane_mask_kernel,
        out_shape=jax.ShapeDtypeStruct((p, c), x2.dtype),
        grid=(pl.cdiv(p, tp), pl.cdiv(c, tc)),
        in_specs=[
            pl.BlockSpec((1, tc), lambda i, j: (0, j)),
            pl.BlockSpec((tp, tc), lambda i, j: (i, j)),
        ],
        out_specs=pl.BlockSpec((tp, tc), lambda i, j: (i, j)),
        compiler_params=pltpu.CompilerParams(
            dimension_semantics=("parallel", "parallel")),
    )(mask_row, x2)


def _masked_mul_middle_3d(mask_col, x3):
    """x3: (P, C, R) masked along the middle dim with mask_col: (C, 1).

    No HBM transpose: leading dim stays in place (squeezed, block size 1);
    the mask broadcast is expressed purely through the BlockSpecs.
    """
    p, c, r = x3.shape
    tc, tr = _sublane_tile(c), _lane_tile(r)
    return pl.pallas_call(
        _row_mask_kernel,
        out_shape=jax.ShapeDtypeStruct((p, c, r), x3.dtype),
        grid=(p, pl.cdiv(c, tc), pl.cdiv(r, tr)),
        in_specs=[
            pl.BlockSpec((tc, 1), lambda b, i, j: (i, 0)),
            pl.BlockSpec((None, tc, tr), lambda b, i, j: (b, i, j)),
        ],
        out_specs=pl.BlockSpec((None, tc, tr), lambda b, i, j: (b, i, j)),
        compiler_params=pltpu.CompilerParams(
            dimension_semantics=("parallel", "parallel", "parallel")),
    )(mask_col, x3)


# ------------------------------ public API ------------------------------------


def apply_filter_binary_mask_pallas(filter_mask,
                                    module_parameter,
                                    node_name_for_logging="",
                                    dim=0,
                                    min_pallas_bytes=_DEFAULT_MIN_PALLAS_BYTES):
    """Pallas equivalent of nncf apply_filter_binary_mask."""
    shape = module_parameter.shape
    ndim = len(shape)
    if dim < 0:
        dim += ndim
    mask = jnp.ravel(filter_mask)
    if mask.shape[0] != shape[dim]:
        raise ValueError(
            f"Shape of mask = {filter_mask.shape} for module "
            f"{node_name_for_logging} isn't broadcastable to weight "
            f"shape={shape} along dim={dim}.")

    mask = mask.astype(module_parameter.dtype)  # keep multiply in param dtype
    c = shape[dim]
    pre = int(np.prod(shape[:dim], dtype=np.int64)) if dim > 0 else 1
    post = int(np.prod(shape[dim + 1:], dtype=np.int64)) if dim + 1 < ndim else 1

    # Tiny parameters (biases, small conv kernels): per-pallas_call overhead
    # dominates -> single fused XLA multiply instead of a kernel launch.
    nbytes = int(module_parameter.size) * module_parameter.dtype.itemsize
    if nbytes < min_pallas_bytes:
        bshape = [1] * max(ndim, 1)
        bshape[dim] = c
        return module_parameter * mask.reshape(bshape)

    if post == 1:
        # Masked axis is (effectively) the last one (covers 1-D bias as (1,C)):
        # lane-indexed mask -> lane-dense stores.
        out = _masked_mul_lanemask_2d(mask.reshape(1, c),
                                      module_parameter.reshape(pre, c))
    elif pre == 1:
        # dim == 0 (conv/linear weights): flatten the rest into a wide
        # lane-dense slab, mask along sublanes.
        out = _masked_mul_rowmask_2d(mask.reshape(c, 1),
                                     module_parameter.reshape(c, post))
    else:
        # Middle dim (e.g. ConvTranspose weight masked on dim=1): contiguous
        # reshape only, no HBM transpose.
        out = _masked_mul_middle_3d(mask.reshape(c, 1),
                                    module_parameter.reshape(pre, c, post))
    return out.reshape(shape)


class FilterPruningMask:
    """JAX/Pallas port of nncf.torch FilterPruningMask (forward pass)."""

    MASK_APPLYING_DIM_KEY = "dim"
    NODE_NAME_KEY = "node_name"
    SIZE_KEY = "size_key"

    def __init__(self, size, node_name, dim=0, dtype=jnp.float32,
                 min_pallas_bytes=_DEFAULT_MIN_PALLAS_BYTES):
        if isinstance(size, int):
            size = (size,)
        self.binary_filter_pruning_mask = jnp.ones(tuple(size), dtype=dtype)
        self.mask_applying_dim = dim
        self.node_name = node_name
        self.min_pallas_bytes = min_pallas_bytes

    def forward(self, **params):
        new_params = []
        for param_name, param_value in params.items():
            if param_value is None:
                new_params.append(param_value)
                continue
            dim = 0 if param_name == "bias" else self.mask_applying_dim
            new_params.append(apply_filter_binary_mask_pallas(
                self.binary_filter_pruning_mask, param_value,
                node_name_for_logging=self.node_name, dim=dim,
                min_pallas_bytes=self.min_pallas_bytes))
        return new_params

    __call__ = forward

    def get_config(self):
        return {self.MASK_APPLYING_DIM_KEY: self.mask_applying_dim,
                self.NODE_NAME_KEY: self.node_name,
                self.SIZE_KEY: list(self.binary_filter_pruning_mask.shape)}

    @classmethod
    def from_config(cls, state):
        return cls(size=state[cls.SIZE_KEY],
                   node_name=state[cls.NODE_NAME_KEY],
                   dim=state[cls.MASK_APPLYING_DIM_KEY])


if __name__ == "__main__":
    key = jax.random.PRNGKey(0)
    kw, kb, kt = jax.random.split(key, 3)

    # Small conv-style parameters: weight OIHW masked on dim=0, bias on dim=0.
    c_out, c_in, kh, kwid = 16, 8, 3, 3
    weight = jax.random.normal(kw, (c_out, c_in, kh, kwid), dtype=jnp.float32)
    bias = jax.random.normal(kb, (c_out,), dtype=jnp.float32)
    # ConvTranspose-style weight [Cin, Cout, Kh, Kw], masked on dim=1.
    weight_t = jax.random.normal(kt, (c_in, c_out, kh, kwid), dtype=jnp.float32)

    # min_pallas_bytes=0 forces the Pallas path even at these demo sizes
    # (default 1 MiB threshold would route them to the fused-XLA fast path).
    m0 = FilterPruningMask(size=c_out, node_name="conv1", dim=0,
                           min_pallas_bytes=0)
    m1 = FilterPruningMask(size=c_out, node_name="deconv1", dim=1,
                           min_pallas_bytes=0)

    mask = jnp.asarray(np.tile([1.0, 0.0], c_out // 2), dtype=jnp.float32)
    m0.binary_filter_pruning_mask = mask
    m1.binary_filter_pruning_mask = mask

    masked_weight, masked_bias = m0(weight=weight, bias=bias)     # row-mask + lane-mask kernels
    (masked_weight_t,) = m1(weight=weight_t)                      # middle-dim (3-D) kernel
    masked_weight, masked_bias, masked_weight_t = jax.block_until_ready(
        (masked_weight, masked_bias, masked_weight_t))

    # Reference check against plain-JAX broadcasting semantics (exact).
    ref_w = weight * mask.reshape(c_out, 1, 1, 1)
    ref_b = bias * mask
    ref_wt = weight_t * mask.reshape(1, c_out, 1, 1)
    assert masked_weight.shape == weight.shape
    assert masked_bias.shape == bias.shape
    assert masked_weight_t.shape == weight_t.shape
    np.testing.assert_array_equal(np.asarray(masked_weight), np.asarray(ref_w))
    np.testing.assert_array_equal(np.asarray(masked_bias), np.asarray(ref_b))
    np.testing.assert_array_equal(np.asarray(masked_weight_t), np.asarray(ref_wt))

    print("KERNEL_OK")
</pallas_src>

<mosaic_0001>
module attributes {stable_mosaic.version = 11 : i64} {
  func.func @_row_mask_kernel(%arg0: i32, %arg1: i32, %arg2: memref<16x1xf32, #tpu.memory_space<vmem>>, %arg3: memref<16x72xf32, #tpu.memory_space<vmem>>, %arg4: memref<16x72xf32, #tpu.memory_space<vmem>>) attributes {dimension_semantics = [#tpu.dimension_semantics<parallel>, #tpu.dimension_semantics<parallel>], iteration_bounds = array<i64: 1, 1>, scalar_prefetch = 0 : i64, scratch_operands = 0 : i64, tpu.core_type = #tpu.core_type<tc>, window_params = [{transform_indices = @transform_0, window_bounds = array<i64: 16, 1>}, {transform_indices = @transform_1, window_bounds = array<i64: 16, 72>}, {transform_indices = @transform_2, window_bounds = array<i64: 16, 72>}]} {
    %c0 = arith.constant 0 : index
    %c0_0 = arith.constant 0 : index
    %0 = vector.load %arg3[%c0, %c0_0] : memref<16x72xf32, #tpu.memory_space<vmem>>, vector<16x72xf32>
    %c0_1 = arith.constant 0 : index
    %c0_2 = arith.constant 0 : index
    %1 = vector.load %arg2[%c0_1, %c0_2] : memref<16x1xf32, #tpu.memory_space<vmem>>, vector<16x1xf32>
    %2 = vector.broadcast %1 : vector<16x1xf32> to vector<16x72xf32>
    %3 = arith.mulf %0, %2 : vector<16x72xf32>
    %c0_3 = arith.constant 0 : index
    %c0_4 = arith.constant 0 : index
    %4 = vector.load %arg4[%c0_3, %c0_4] : memref<16x72xf32, #tpu.memory_space<vmem>>, vector<16x72xf32>
    tpu.vector_store %arg4[%c0_3, %c0_4], %3 {strides = array<i32>} : memref<16x72xf32, #tpu.memory_space<vmem>>, vector<16x72xf32>,
    return
  }
  func.func @transform_0(%arg0: i32, %arg1: i32) -> (i32, i32) {
    %c0_i32 = arith.constant 0 : i32
    %c0_i32_0 = arith.constant 0 : i32
    return %arg0, %c0_i32 : i32, i32
  }
  func.func @transform_1(%arg0: i32, %arg1: i32) -> (i32, i32) {
    %c0_i32 = arith.constant 0 : i32
    return %arg0, %arg1 : i32, i32
  }
  func.func @transform_2(%arg0: i32, %arg1: i32) -> (i32, i32) {
    %c0_i32 = arith.constant 0 : i32
    return %arg0, %arg1 : i32, i32
  }
}

</mosaic_0001>

<llo_original>
// kernel: tpu_custom_call.1
$region0: #{tpu_custom_call.1}
  #allocation0 [shape = 'u32[]', space=smem, size = 0x4, offset = 0x4, fixed_abs, tag = 'smem constant byte address 0x4 - core index']
  #allocation1 [shape = 'u32[144,128]{1,0:T(1,128)}', space=vmem, size = 0x12000, scoped, tag = 'internal scratch']
  %s0 = inlined_call_operand.vmem [shape: f32[16,1], index: 0, kind: input, shape index: {}]
  %s1 = inlined_call_operand.vmem [shape: f32[16,72], index: 1, kind: input, shape index: {}]
  %s2 = inlined_call_operand.hbm [shape: f32[16,72], index: 2, kind: output, shape index: {}]
  %s3 = sld [smem:[#allocation0]]
  $region18: #{tpu_custom_call.1} parent=0
    _
  %s5 = ssub.s32 1, %s3
  %s6 = scalar_select 0, %s5, %s3
  $region1: #{tpu_custom_call.1} parent=0
    #allocation2 [shape = 'u8[8192]{0}', space=vmem, size = 0x2000, scoped, tag = 'output window, operand 0, single buffered']
    #allocation3 [shape = 's32[1]{0}', space=sflag, size = 0x4, scoped, tag = 'scoped memory for tpu_custom_call.1']
    %7 = vsyncpa [#allocation3], 0
    // Predicated region
    $region2: #{tpu_custom_call.1} parent=1 // pred_check
      _
    $region3: #{tpu_custom_call.1} parent=1 // pred_check_branch
      %9 = sbr.rel (0) target = $region5
    $region4: #{tpu_custom_call.1} parent=1 // pred_region
      _
    $region5: #{tpu_custom_call.1} parent=1 // pred_fallthru
      _
    // Predicated region
    $region6: #{tpu_custom_call.1} parent=1 // pred_check
      _
    $region7: #{tpu_custom_call.1} parent=1 // pred_check_branch
      %11 = sbr.rel (0) target = $region9
    $region8: #{tpu_custom_call.1} parent=1 // pred_region
      _
    $region9: #{tpu_custom_call.1} parent=1 // pred_fallthru
      _
    %v12 = vld [vmem:[%s1] sm:$0xff]
    %v13 = vld [vmem:[%s1 + $0x8] sm:$0xff]
    %v14 = vld [vmem:[%s0] sm:$0xff]
    %v15 = vld [vmem:[%s0 + $0x8] sm:$0xff]
    %17 = vset.pattern.permute.xlu0 0
    %18 = vperm.xlu0 %17, %v14
    %v19 = vpop.permute.xlu0 %18
    %22 = vset.pattern.permute.xlu0 0
    %23 = vperm.xlu0 %22, %v15
    %v24 = vpop.permute.xlu0 %23
    %v26 = vmul.f32 %v12, %v19
    %v27 = vmul.f32 %v13, %v24
    %vm28 = vcmask 588800
    %29 = vst.msk [vmem:[#allocation2] sm:$0xff] %vm28, %v26
    %30 = vst.msk [vmem:[#allocation2 + $0x8] sm:$0xff] %vm28, %v27
    // Predicated region
    $region10: #{tpu_custom_call.1} parent=1 // pred_check
      _
    $region11: #{tpu_custom_call.1} parent=1 // pred_check_branch
      %32 = sbr.rel (0) target = $region13
    $region12: #{tpu_custom_call.1} parent=1 // pred_region
      %s34 = ssub.s32 256, 256
      %35 = vsyncadd [#allocation3], %s34
      %s36 = sshll.u32 [#allocation2], 4
      %s37 = int_to_ptr.vmem [resolvable:$true] %s36
      %42 = dma.vmem_to_hbm [thread:$0]  %s37, 256, %s2, [#allocation3], 128, 128, 8
    $region13: #{tpu_custom_call.1} parent=1 // pred_fallthru
      _
    // Predicated region
    $region14: #{tpu_custom_call.1} parent=1 // pred_check
      _
    $region15: #{tpu_custom_call.1} parent=1 // pred_check_branch
      %44 = sbr.rel (0) target = $region17
    $region16: #{tpu_custom_call.1} parent=1 // pred_region
      %45 = dma.done [#allocation3], 256
    $region17: #{tpu_custom_call.1} parent=1 // pred_fallthru
      _
    %46 = vsyncpa [#allocation3], 1

</llo_original>
